<compile_context>
chip_gen: v7x
topology: tpu7x:2x2x1
jax: 0.10.0
libtpu: 0.0.40
codegen_flags: <defaults>
</compile_context>

<pallas_src>
import functools

import jax
import jax.numpy as jnp
import numpy as np
from jax.experimental import pallas as pl
from jax.experimental.pallas import tpu as pltpu


# ---------------------------------------------------------------------------
# Host-side constants (built once per shape, cached)
# ---------------------------------------------------------------------------
def _adaptive_pool_matrix_np(in_size: int, out_size: int) -> np.ndarray:
    """P[i, k] = 1/|bin_i| if k in [floor(i*in/out), ceil((i+1)*in/out)) else 0."""
    i = np.arange(out_size)
    starts = (i * in_size) // out_size                      # floor
    ends = -((-(i + 1) * in_size) // out_size)              # ceil
    k = np.arange(in_size)
    mask = (k[None, :] >= starts[:, None]) & (k[None, :] < ends[:, None])
    counts = (ends - starts).astype(np.float64)
    return mask.astype(np.float64) / counts[:, None]        # (out_size, in_size)


@functools.lru_cache(maxsize=None)
def pooling_operator(H: int, W: int, L: int, D: int):
    """Full 2-D adaptive-avg-pool as one matrix: (H*W, L*D), cached as a device constant."""
    p_h = _adaptive_pool_matrix_np(H, L)                    # (L, H)
    p_w = _adaptive_pool_matrix_np(W, D)                    # (D, W)
    q = np.einsum("lh,dw->hwld", p_h, p_w).reshape(H * W, L * D)
    return jnp.asarray(q, dtype=jnp.float32)


def build_encoding(d_model: int, max_length: int):
    """Reproduce the PyTorch buffer: zeros(64, L, D) with sinusoids at channel index 0 only."""
    position = np.arange(max_length, dtype=np.float64)[:, None]            # (L, 1)
    div_term = np.exp(
        np.arange(0, d_model, 2, dtype=np.float64) * (-np.log(10000.0) / d_model)
    )                                                                      # (D/2,)
    pe = np.zeros((max_length, d_model), dtype=np.float64)
    pe[:, 0::2] = np.sin(position * div_term)
    pe[:, 1::2] = np.cos(position * div_term)
    enc = np.zeros((64, max_length, d_model), dtype=np.float32)
    enc[0] = pe.astype(np.float32)
    return jnp.asarray(enc)                                                # (64, L, D)


# ---------------------------------------------------------------------------
# Pallas kernel: out = x2 @ Q  (+ encoding[0] on channel-0 rows)
#   x_ref  : (N*C, H*W)  lane-dense input (batch folded into M)
#   q_ref  : (H*W, L*D)  constant pooling operator
#   pe_ref : (1, L*D)    encoding[0] flattened
#   o_ref  : (N*C, L*D)  lane-dense output
# ---------------------------------------------------------------------------
def pe_kernel(x_ref, q_ref, pe_ref, o_ref, *, n_batch, channels):
    # One lane-dense MXU matmul, f32 accumulate.
    out = jnp.dot(x_ref[...], q_ref[...], preferred_element_type=jnp.float32)
    o_ref[...] = out
    # Contract: only encoding[0] is nonzero in the module's buffer, so the add touches
    # exactly one channel-0 row per batch element (row n*C in the folded layout).
    pe = pe_ref[...]                                        # (1, LD)
    for n in range(n_batch):                                # static tiny loop (N rows)
        r = n * channels
        o_ref[r:r + 1, :] = out[r:r + 1, :] + pe


def positional_encoding_forward(x, encoding):
    """Forward of PositionalEncoding.

    Contract (documented, matches the PyTorch module's default buffer): only
    encoding[0] may be nonzero; channels 1..63 of the buffer are never streamed.
    """
    N, C, H, W = x.shape
    Ce, L, D = encoding.shape
    assert C == Ce, "channel dim must match encoding's first dim (64 in the module)"
    HW, LD = H * W, L * D

    q = pooling_operator(H, W, L, D)            # cached constant, no per-call build
    pe_flat = encoding[0].reshape(1, LD)        # the only nonzero slice of the buffer
    x2 = x.reshape(N * C, HW)                   # contiguous reshape (free): fold batch into M

    kernel = functools.partial(pe_kernel, n_batch=N, channels=C)
    out_flat = pl.pallas_call(
        kernel,
        out_shape=jax.ShapeDtypeStruct((N * C, LD), jnp.float32),
        grid_spec=pltpu.PrefetchScalarGridSpec(
            num_scalar_prefetch=0,
            grid=(1,),                                           # single step: kernel is overhead-bound
            in_specs=[
                pl.BlockSpec((N * C, HW), lambda i: (0, 0)),     # x2 (full block)
                pl.BlockSpec((HW, LD), lambda i: (0, 0)),        # Q  (constant)
                pl.BlockSpec((1, LD), lambda i: (0, 0)),         # pe (constant)
            ],
            out_specs=pl.BlockSpec((N * C, LD), lambda i: (0, 0)),
        ),
        compiler_params=pltpu.CompilerParams(
            dimension_semantics=("arbitrary",),   # 'parallel' is a no-op with one grid step
        ),
    )(x2, q, pe_flat)
    return out_flat.reshape(N, C, L, D)          # contiguous reshape (free)


# ---------------------------------------------------------------------------
# Independent host reference (numpy float64) — uses the FULL encoding buffer
# ---------------------------------------------------------------------------
def reference_forward_np(x, encoding):
    N, C, H, W = x.shape
    _, L, D = encoding.shape
    p_h = _adaptive_pool_matrix_np(H, L)         # (L, H)
    p_w = _adaptive_pool_matrix_np(W, D)         # (D, W)
    pooled = np.einsum("lh,nchw,dw->ncld", p_h, x.astype(np.float64), p_w)
    return pooled + encoding.astype(np.float64)[None]


if __name__ == "__main__":
    # Channels must be 64 so pooled (N, 64, L, D) broadcasts against encoding (64, L, D),
    # exactly as in the PyTorch module.
    d_model = 32
    max_length = 8
    N, C, H, W = 2, 64, 16, 16

    key = jax.random.PRNGKey(0)
    x = jax.random.normal(key, (N, C, H, W), dtype=jnp.float32)
    encoding = build_encoding(d_model, max_length)
    # Kernel contract check: only encoding[0] is nonzero (true for the module's buffer).
    assert bool(jnp.all(encoding[1:] == 0)), "kernel assumes encoding[1:] == 0"

    out = jax.block_until_ready(positional_encoding_forward(x, encoding))
    assert out.shape == (N, C, max_length, d_model)

    ref = reference_forward_np(np.asarray(x), np.asarray(encoding))
    # Tolerance accommodates possible bf16-pass MXU behaviour for f32 matmuls under the
    # default precision; a genuine pooling/indexing bug would produce O(1) errors.
    assert np.allclose(np.asarray(out, np.float64), ref, atol=1e-2, rtol=1e-2), \
        "mismatch vs reference"

    print("KERNEL_OK")
</pallas_src>

<mosaic_0001>
module attributes {stable_mosaic.version = 11 : i64} {
  func.func @pe_kernel(%arg0: i32, %arg1: memref<128x256xf32, #tpu.memory_space<vmem>>, %arg2: memref<256x256xf32, #tpu.memory_space<vmem>>, %arg3: memref<1x256xf32, #tpu.memory_space<vmem>>, %arg4: memref<128x256xf32, #tpu.memory_space<vmem>>) attributes {dimension_semantics = [#tpu.dimension_semantics<arbitrary>], iteration_bounds = array<i64: 1>, scalar_prefetch = 0 : i64, scratch_operands = 0 : i64, tpu.core_type = #tpu.core_type<tc>, window_params = [{pipeline_mode = #tpu.pipeline_mode<synchronous>, transform_indices = @transform_0, window_bounds = array<i64: 128, 256>}, {pipeline_mode = #tpu.pipeline_mode<synchronous>, transform_indices = @transform_1, window_bounds = array<i64: 256, 256>}, {pipeline_mode = #tpu.pipeline_mode<synchronous>, transform_indices = @transform_2, window_bounds = array<i64: 1, 256>}, {pipeline_mode = #tpu.pipeline_mode<synchronous>, transform_indices = @transform_3, window_bounds = array<i64: 128, 256>}]} {
    %c0 = arith.constant 0 : index
    %c0_0 = arith.constant 0 : index
    %0 = vector.load %arg1[%c0, %c0_0] : memref<128x256xf32, #tpu.memory_space<vmem>>, vector<128x256xf32>
    %c0_1 = arith.constant 0 : index
    %c0_2 = arith.constant 0 : index
    %1 = vector.load %arg2[%c0_1, %c0_2] : memref<256x256xf32, #tpu.memory_space<vmem>>, vector<256x256xf32>
    %cst = arith.constant dense<0.000000e+00> : vector<128x256xf32>
    %2 = tpu.matmul %0, %1, %cst {dimension_numbers = #tpu.dot_dimension_numbers<[1], [0], [0], [1], [0, 0, 1, 1], [], []>} : vector<128x256xf32>, vector<256x256xf32>, vector<128x256xf32> -> vector<128x256xf32>
    %c0_3 = arith.constant 0 : index
    %c0_4 = arith.constant 0 : index
    %3 = vector.load %arg4[%c0_3, %c0_4] : memref<128x256xf32, #tpu.memory_space<vmem>>, vector<128x256xf32>
    tpu.vector_store %arg4[%c0_3, %c0_4], %2 {strides = array<i32>} : memref<128x256xf32, #tpu.memory_space<vmem>>, vector<128x256xf32>,
    %c0_5 = arith.constant 0 : index
    %c0_6 = arith.constant 0 : index
    %4 = vector.load %arg3[%c0_5, %c0_6] : memref<1x256xf32, #tpu.memory_space<vmem>>, vector<1x256xf32>
    %5 = vector.extract_strided_slice %2 {offsets = [0, 0], sizes = [1, 256], strides = [1, 1]} : vector<128x256xf32> to vector<1x256xf32>
    %6 = arith.addf %5, %4 : vector<1x256xf32>
    %c0_7 = arith.constant 0 : index
    %c0_8 = arith.constant 0 : index
    %7 = vector.load %arg4[%c0_7, %c0_8] : memref<128x256xf32, #tpu.memory_space<vmem>>, vector<1x256xf32>
    tpu.vector_store %arg4[%c0_7, %c0_8], %6 {strides = array<i32>} : memref<128x256xf32, #tpu.memory_space<vmem>>, vector<1x256xf32>,
    %8 = vector.extract_strided_slice %2 {offsets = [64, 0], sizes = [1, 256], strides = [1, 1]} : vector<128x256xf32> to vector<1x256xf32>
    %9 = arith.addf %8, %4 : vector<1x256xf32>
    %c64 = arith.constant 64 : index
    %c0_9 = arith.constant 0 : index
    %10 = vector.load %arg4[%c64, %c0_9] : memref<128x256xf32, #tpu.memory_space<vmem>>, vector<1x256xf32>
    tpu.vector_store %arg4[%c64, %c0_9], %9 {strides = array<i32>} : memref<128x256xf32, #tpu.memory_space<vmem>>, vector<1x256xf32>,
    return
  }
  func.func @transform_0(%arg0: i32) -> (i32, i32) {
    %c0_i32 = arith.constant 0 : i32
    %c0_i32_0 = arith.constant 0 : i32
    %c0_i32_1 = arith.constant 0 : i32
    return %c0_i32, %c0_i32_0 : i32, i32
  }
  func.func @transform_1(%arg0: i32) -> (i32, i32) {
    %c0_i32 = arith.constant 0 : i32
    %c0_i32_0 = arith.constant 0 : i32
    %c0_i32_1 = arith.constant 0 : i32
    return %c0_i32, %c0_i32_0 : i32, i32
  }
  func.func @transform_2(%arg0: i32) -> (i32, i32) {
    %c0_i32 = arith.constant 0 : i32
    %c0_i32_0 = arith.constant 0 : i32
    %c0_i32_1 = arith.constant 0 : i32
    return %c0_i32, %c0_i32_0 : i32, i32
  }
  func.func @transform_3(%arg0: i32) -> (i32, i32) {
    %c0_i32 = arith.constant 0 : i32
    %c0_i32_0 = arith.constant 0 : i32
    %c0_i32_1 = arith.constant 0 : i32
    return %c0_i32, %c0_i32_0 : i32, i32
  }
}

</mosaic_0001>

<llo_original>
// kernel: tpu_custom_call.1
$region0: #{tpu_custom_call.1}
  #allocation0 [shape = 'u32[]', space=smem, size = 0x4, offset = 0x4, fixed_abs, tag = 'smem constant byte address 0x4 - core index']
  #allocation1 [shape = 'u32[144,128]{1,0:T(1,128)}', space=vmem, size = 0x12000, scoped, tag = 'internal scratch']
  %s0 = inlined_call_operand.hbm [shape: f32[128,256], index: 0, kind: input, shape index: {}]
  %s1 = inlined_call_operand.hbm [shape: f32[256,256], index: 1, kind: input, shape index: {}]
  %s2 = inlined_call_operand.vmem [shape: f32[1,256], index: 2, kind: input, shape index: {}]
  %s3 = inlined_call_operand.hbm [shape: f32[128,256], index: 3, kind: output, shape index: {}]
  %s4 = sld [smem:[#allocation0]]
  $region30: #{tpu_custom_call.1} parent=0
    _
  %s6 = ssub.s32 1, %s4
  %s7 = scalar_select 0, %s6, %s4
  $region1: #{tpu_custom_call.1} parent=0
    #allocation2 [shape = 'u8[131072]{0}', space=vmem, size = 0x20000, scoped, tag = 'input window, operand 0, single buffered']
    #allocation3 [shape = 's32[1]{0}', space=sflag, size = 0x4, scoped, tag = 'scoped memory for tpu_custom_call.1']
    #allocation4 [shape = 's32[1]{0}', space=sflag, size = 0x4, scoped, tag = 'scoped memory for tpu_custom_call.1']
    #allocation5 [shape = 'u8[262144]{0}', space=vmem, size = 0x40000, scoped, tag = 'input window, operand 1, single buffered']
    #allocation6 [shape = 's32[1]{0}', space=sflag, size = 0x4, scoped, tag = 'scoped memory for tpu_custom_call.1']
    #allocation7 [shape = 'u8[131072]{0}', space=vmem, size = 0x20000, scoped, tag = 'output window, operand 0, single buffered']
    %8 = vsyncpa [#allocation3], 0
    %9 = vsyncpa [#allocation6], 0
    %10 = vsyncpa [#allocation4], 0
    // Predicated region
    $region2: #{tpu_custom_call.1} parent=1 // pred_check
      _
    $region3: #{tpu_custom_call.1} parent=1 // pred_check_branch
      %12 = sbr.rel (0) target = $region5
    $region4: #{tpu_custom_call.1} parent=1 // pred_region
      %s14 = ssub.s32 4096, 4096
      %15 = vsyncadd [#allocation3], %s14
      %s16 = sshll.u32 [#allocation2], 4
      %s17 = int_to_ptr.vmem [resolvable:$true] %s16
      %22 = dma.hbm_to_vmem [thread:$0]  %s0, 4096, %s17, [#allocation3], 256, 256, 16
    $region5: #{tpu_custom_call.1} parent=1 // pred_fallthru
      _
    // Predicated region
    $region6: #{tpu_custom_call.1} parent=1 // pred_check
      _
    $region7: #{tpu_custom_call.1} parent=1 // pred_check_branch
      %24 = sbr.rel (0) target = $region9
    $region8: #{tpu_custom_call.1} parent=1 // pred_region
      %s26 = ssub.s32 8192, 8192
      %27 = vsyncadd [#allocation6], %s26
      %s28 = sshll.u32 [#allocation5], 4
      %s29 = int_to_ptr.vmem [resolvable:$true] %s28
      %34 = dma.hbm_to_vmem [thread:$0]  %s1, 8192, %s29, [#allocation6], 256, 256, 16
    $region9: #{tpu_custom_call.1} parent=1 // pred_fallthru
      _
    // Predicated region
    $region10: #{tpu_custom_call.1} parent=1 // pred_check
      _
    $region11: #{tpu_custom_call.1} parent=1 // pred_check_branch
      %36 = sbr.rel (0) target = $region13
    $region12: #{tpu_custom_call.1} parent=1 // pred_region
      _
    $region13: #{tpu_custom_call.1} parent=1 // pred_fallthru
      _
    // Predicated region
    $region14: #{tpu_custom_call.1} parent=1 // pred_check
      _
    $region15: #{tpu_custom_call.1} parent=1 // pred_check_branch
      %38 = sbr.rel (0) target = $region17
    $region16: #{tpu_custom_call.1} parent=1 // pred_region
      %39 = dma.done [#allocation3], 4096
    $region17: #{tpu_custom_call.1} parent=1 // pred_fallthru
      _
    // Predicated region
    $region18: #{tpu_custom_call.1} parent=1 // pred_check
      _
    $region19: #{tpu_custom_call.1} parent=1 // pred_check_branch
      %41 = sbr.rel (0) target = $region21
    $region20: #{tpu_custom_call.1} parent=1 // pred_region
      %42 = dma.done [#allocation6], 8192
    $region21: #{tpu_custom_call.1} parent=1 // pred_fallthru
      _
    %v43 = vld [vmem:[#allocation2] sm:$0xff]
    %v44 = vld [vmem:[#allocation2 + $0x8] sm:$0xff]
    %v45 = vld [vmem:[#allocation2 + $0x10] sm:$0xff]
    %v46 = vld [vmem:[#allocation2 + $0x18] sm:$0xff]
    %v47 = vld [vmem:[#allocation2 + $0x20] sm:$0xff]
    %v48 = vld [vmem:[#allocation2 + $0x28] sm:$0xff]
    %v49 = vld [vmem:[#allocation2 + $0x30] sm:$0xff]
    %v50 = vld [vmem:[#allocation2 + $0x38] sm:$0xff]
    %v51 = vld [vmem:[#allocation2 + $0x40] sm:$0xff]
    %v52 = vld [vmem:[#allocation2 + $0x48] sm:$0xff]
    %v53 = vld [vmem:[#allocation2 + $0x50] sm:$0xff]
    %v54 = vld [vmem:[#allocation2 + $0x58] sm:$0xff]
    %v55 = vld [vmem:[#allocation2 + $0x60] sm:$0xff]
    %v56 = vld [vmem:[#allocation2 + $0x68] sm:$0xff]
    %v57 = vld [vmem:[#allocation2 + $0x70] sm:$0xff]
    %v58 = vld [vmem:[#allocation2 + $0x78] sm:$0xff]
    %v59 = vld [vmem:[#allocation2 + $0x80] sm:$0xff]
    %v60 = vld [vmem:[#allocation2 + $0x88] sm:$0xff]
    %v61 = vld [vmem:[#allocation2 + $0x90] sm:$0xff]
    %v62 = vld [vmem:[#allocation2 + $0x98] sm:$0xff]
    %v63 = vld [vmem:[#allocation2 + $0xa0] sm:$0xff]
    %v64 = vld [vmem:[#allocation2 + $0xa8] sm:$0xff]
    %v65 = vld [vmem:[#allocation2 + $0xb0] sm:$0xff]
    %v66 = vld [vmem:[#allocation2 + $0xb8] sm:$0xff]
    %v67 = vld [vmem:[#allocation2 + $0xc0] sm:$0xff]
    %v68 = vld [vmem:[#allocation2 + $0xc8] sm:$0xff]
    %v69 = vld [vmem:[#allocation2 + $0xd0] sm:$0xff]
    %v70 = vld [vmem:[#allocation2 + $0xd8] sm:$0xff]
    %v71 = vld [vmem:[#allocation2 + $0xe0] sm:$0xff]
    %v72 = vld [vmem:[#allocation2 + $0xe8] sm:$0xff]
    %v73 = vld [vmem:[#allocation2 + $0xf0] sm:$0xff]
    %v74 = vld [vmem:[#allocation2 + $0xf8] sm:$0xff]
    %v75 = vld [vmem:[#allocation5] sm:$0xff]
    %v76 = vld [vmem:[#allocation5 + $0x8] sm:$0xff]
    %v77 = vld [vmem:[#allocation5 + $0x10] sm:$0xff]
    %v78 = vld [vmem:[#allocation5 + $0x18] sm:$0xff]
    %v79 = vld [vmem:[#allocation5 + $0x20] sm:$0xff]
    %v80 = vld [vmem:[#allocation5 + $0x28] sm:$0xff]
    %v81 = vld [vmem:[#allocation5 + $0x30] sm:$0xff]
    %v82 = vld [vmem:[#allocation5 + $0x38] sm:$0xff]
    %v83 = vld [vmem:[#allocation5 + $0x40] sm:$0xff]
    %v84 = vld [vmem:[#allocation5 + $0x48] sm:$0xff]
    %v85 = vld [vmem:[#allocation5 + $0x50] sm:$0xff]
    %v86 = vld [vmem:[#allocation5 + $0x58] sm:$0xff]
    %v87 = vld [vmem:[#allocation5 + $0x60] sm:$0xff]
    %v88 = vld [vmem:[#allocation5 + $0x68] sm:$0xff]
    %v89 = vld [vmem:[#allocation5 + $0x70] sm:$0xff]
    %v90 = vld [vmem:[#allocation5 + $0x78] sm:$0xff]
    %v91 = vld [vmem:[#allocation5 + $0x80] sm:$0xff]
    %v92 = vld [vmem:[#allocation5 + $0x88] sm:$0xff]
    %v93 = vld [vmem:[#allocation5 + $0x90] sm:$0xff]
    %v94 = vld [vmem:[#allocation5 + $0x98] sm:$0xff]
    %v95 = vld [vmem:[#allocation5 + $0xa0] sm:$0xff]
    %v96 = vld [vmem:[#allocation5 + $0xa8] sm:$0xff]
    %v97 = vld [vmem:[#allocation5 + $0xb0] sm:$0xff]
    %v98 = vld [vmem:[#allocation5 + $0xb8] sm:$0xff]
    %v99 = vld [vmem:[#allocation5 + $0xc0] sm:$0xff]
    %v100 = vld [vmem:[#allocation5 + $0xc8] sm:$0xff]
    %v101 = vld [vmem:[#allocation5 + $0xd0] sm:$0xff]
    %v102 = vld [vmem:[#allocation5 + $0xd8] sm:$0xff]
    %v103 = vld [vmem:[#allocation5 + $0xe0] sm:$0xff]
    %v104 = vld [vmem:[#allocation5 + $0xe8] sm:$0xff]
    %v105 = vld [vmem:[#allocation5 + $0xf0] sm:$0xff]
    %v106 = vld [vmem:[#allocation5 + $0xf8] sm:$0xff]
    %v107 = vld [vmem:[#allocation5 + $0x100] sm:$0xff]
    %v108 = vld [vmem:[#allocation5 + $0x108] sm:$0xff]
    %v109 = vld [vmem:[#allocation5 + $0x110] sm:$0xff]
    %v110 = vld [vmem:[#allocation5 + $0x118] sm:$0xff]
    %v111 = vld [vmem:[#allocation5 + $0x120] sm:$0xff]
    %v112 = vld [vmem:[#allocation5 + $0x128] sm:$0xff]
    %v113 = vld [vmem:[#allocation5 + $0x130] sm:$0xff]
    %v114 = vld [vmem:[#allocation5 + $0x138] sm:$0xff]
    %v115 = vld [vmem:[#allocation5 + $0x140] sm:$0xff]
    %v116 = vld [vmem:[#allocation5 + $0x148] sm:$0xff]
    %v117 = vld [vmem:[#allocation5 + $0x150] sm:$0xff]
    %v118 = vld [vmem:[#allocation5 + $0x158] sm:$0xff]
    %v119 = vld [vmem:[#allocation5 + $0x160] sm:$0xff]
    %v120 = vld [vmem:[#allocation5 + $0x168] sm:$0xff]
    %v121 = vld [vmem:[#allocation5 + $0x170] sm:$0xff]
    %v122 = vld [vmem:[#allocation5 + $0x178] sm:$0xff]
    %v123 = vld [vmem:[#allocation5 + $0x180] sm:$0xff]
    %v124 = vld [vmem:[#allocation5 + $0x188] sm:$0xff]
    %v125 = vld [vmem:[#allocation5 + $0x190] sm:$0xff]
    %v126 = vld [vmem:[#allocation5 + $0x198] sm:$0xff]
    %v127 = vld [vmem:[#allocation5 + $0x1a0] sm:$0xff]
    %v128 = vld [vmem:[#allocation5 + $0x1a8] sm:$0xff]
    %v129 = vld [vmem:[#allocation5 + $0x1b0] sm:$0xff]
    %v130 = vld [vmem:[#allocation5 + $0x1b8] sm:$0xff]
    %v131 = vld [vmem:[#allocation5 + $0x1c0] sm:$0xff]
    %v132 = vld [vmem:[#allocation5 + $0x1c8] sm:$0xff]
    %v133 = vld [vmem:[#allocation5 + $0x1d0] sm:$0xff]
    %v134 = vld [vmem:[#allocation5 + $0x1d8] sm:$0xff]
    %v135 = vld [vmem:[#allocation5 + $0x1e0] sm:$0xff]
    %v136 = vld [vmem:[#allocation5 + $0x1e8] sm:$0xff]
    %v137 = vld [vmem:[#allocation5 + $0x1f0] sm:$0xff]
    %v138 = vld [vmem:[#allocation5 + $0x1f8] sm:$0xff]
    %139 = vmatprep.subr.mxu0 %v76
    %140 = vmatpush1.msra.mxu0 %v75
    %141 = vmatprep.subr.mxu0 %v78
    %142 = vmatpush1.msra.mxu0 %v77
    %143 = vmatprep.subr.mxu0 %v80
    %144 = vmatpush1.msra.mxu0 %v79
    %145 = vmatprep.subr.mxu0 %v82
    %146 = vmatpush1.msra.mxu0 %v81
    %147 = vmatprep.subr.mxu0 %v84
    %148 = vmatpush1.msra.mxu0 %v83
    %149 = vmatprep.subr.mxu0 %v86
    %150 = vmatpush1.msra.mxu0 %v85
    %151 = vmatprep.subr.mxu0 %v88
    %152 = vmatpush1.msra.mxu0 %v87
    %153 = vmatprep.subr.mxu0 %v90
    %154 = vmatpush1.msra.mxu0 %v89
    %155 = vmatprep.subr.mxu0 %v92
    %156 = vmatpush1.msra.mxu0 %v91
    %157 = vmatprep.subr.mxu0 %v94
    %158 = vmatpush1.msra.mxu0 %v93
    %159 = vmatprep.subr.mxu0 %v96
    %160 = vmatpush1.msra.mxu0 %v95
    %161 = vmatprep.subr.mxu0 %v98
    %162 = vmatpush1.msra.mxu0 %v97
    %163 = vmatprep.subr.mxu0 %v100
    %164 = vmatpush1.msra.mxu0 %v99
    %165 = vmatprep.subr.mxu0 %v102
    %166 = vmatpush1.msra.mxu0 %v101
    %167 = vmatprep.subr.mxu0 %v104
    %168 = vmatpush1.msra.mxu0 %v103
    %169 = vmatprep.subr.mxu0 %v106
    %170 = vmatpush1.msra.mxu0 %v105
    %171 = vmatprep.subr.mxu0 %v108
    %172 = vmatpush1.msra.mxu0 %v107
    %173 = vmatprep.subr.mxu0 %v110
    %174 = vmatpush1.msra.mxu0 %v109
    %175 = vmatprep.subr.mxu0 %v112
    %176 = vmatpush1.msra.mxu0 %v111
    %177 = vmatprep.subr.mxu0 %v114
    %178 = vmatpush1.msra.mxu0 %v113
    %179 = vmatprep.subr.mxu0 %v116
    %180 = vmatpush1.msra.mxu0 %v115
    %181 = vmatprep.subr.mxu0 %v118
    %182 = vmatpush1.msra.mxu0 %v117
    %183 = vmatprep.subr.mxu0 %v120
    %184 = vmatpush1.msra.mxu0 %v119
    %185 = vmatprep.subr.mxu0 %v122
    %186 = vmatpush1.msra.mxu0 %v121
    %187 = vmatprep.subr.mxu0 %v124
    %188 = vmatpush1.msra.mxu0 %v123
    %189 = vmatprep.subr.mxu0 %v126
    %190 = vmatpush1.msra.mxu0 %v125
    %191 = vmatprep.subr.mxu0 %v128
    %192 = vmatpush1.msra.mxu0 %v127
    %193 = vmatprep.subr.mxu0 %v130
    %194 = vmatpush1.msra.mxu0 %v129
    %195 = vmatprep.subr.mxu0 %v132
    %196 = vmatpush1.msra.mxu0 %v131
    %197 = vmatprep.subr.mxu0 %v134
    %198 = vmatpush1.msra.mxu0 %v133
    %199 = vmatprep.subr.mxu0 %v136
    %200 = vmatpush1.msra.mxu0 %v135
    %201 = vmatprep.subr.mxu0 %v138
    %202 = vmatpush1.msra.mxu0 %v137
    %203 = vmatprep.mubr.f32.mxu0 %v44
    %204 = vmatmul.mubr.f32.gmra.mrb[0].mxu0 %v43
    %v205 = vpop.f32.mrb[0].mxu0
    %v206 = vadd.f32 0.0, %v205
    %v207 = vpop.f32.mrb[0].mxu0
    %v208 = vadd.f32 0.0, %v207
    %209 = vmatprep.mubr.f32.mxu0 %v46
    %210 = vmatmul.mubr.f32.gmra.mrb[0].mxu0 %v45
    %v211 = vpop.f32.mrb[0].mxu0
    %v212 = vadd.f32 0.0, %v211
    %v213 = vpop.f32.mrb[0].mxu0
    %v214 = vadd.f32 0.0, %v213
    %215 = vmatprep.mubr.f32.mxu0 %v48
    %216 = vmatmul.mubr.f32.gmra.mrb[0].mxu0 %v47
    %v217 = vpop.f32.mrb[0].mxu0
    %v218 = vadd.f32 0.0, %v217
    %v219 = vpop.f32.mrb[0].mxu0
    %v220 = vadd.f32 0.0, %v219
    %221 = vmatprep.mubr.f32.mxu0 %v50
    %222 = vmatmul.mubr.f32.gmra.mrb[0].mxu0 %v49
    %v223 = vpop.f32.mrb[0].mxu0
    %v224 = vadd.f32 0.0, %v223
    %v225 = vpop.f32.mrb[0].mxu0
    %v226 = vadd.f32 0.0, %v225
    %227 = vmatprep.mubr.f32.mxu0 %v52
    %228 = vmatmul.mubr.f32.gmra.mrb[0].mxu0 %v51
    %v229 = vpop.f32.mrb[0].mxu0
    %v230 = vadd.f32 0.0, %v229
    %v231 = vpop.f32.mrb[0].mxu0
    %v232 = vadd.f32 0.0, %v231
    %233 = vmatprep.mubr.f32.mxu0 %v54
    %234 = vmatmul.mubr.f32.gmra.mrb[0].mxu0 %v53
    %v235 = vpop.f32.mrb[0].mxu0
    %v236 = vadd.f32 0.0, %v235
    %v237 = vpop.f32.mrb[0].mxu0
    %v238 = vadd.f32 0.0, %v237
    %239 = vmatprep.mubr.f32.mxu0 %v56
    %240 = vmatmul.mubr.f32.gmra.mrb[0].mxu0 %v55
    %v241 = vpop.f32.mrb[0].mxu0
    %v242 = vadd.f32 0.0, %v241
    %v243 = vpop.f32.mrb[0].mxu0
    %v244 = vadd.f32 0.0, %v243
    %245 = vmatprep.mubr.f32.mxu0 %v58
    %246 = vmatmul.mubr.f32.gmra.mrb[0].mxu0 %v57
    %v247 = vpop.f32.mrb[0].mxu0
    %v248 = vadd.f32 0.0, %v247
    %v249 = vpop.f32.mrb[0].mxu0
    %v250 = vadd.f32 0.0, %v249
    %251 = vmatprep.mubr.f32.mxu0 %v60
    %252 = vmatmul.mubr.f32.gmra.mrb[0].mxu0 %v59
    %v253 = vpop.f32.mrb[0].mxu0
    %v254 = vadd.f32 0.0, %v253
    %v255 = vpop.f32.mrb[0].mxu0
    %v256 = vadd.f32 0.0, %v255
    %257 = vmatprep.mubr.f32.mxu0 %v62
    %258 = vmatmul.mubr.f32.gmra.mrb[0].mxu0 %v61
    %v259 = vpop.f32.mrb[0].mxu0
    %v260 = vadd.f32 0.0, %v259
    %v261 = vpop.f32.mrb[0].mxu0
    %v262 = vadd.f32 0.0, %v261
    %263 = vmatprep.mubr.f32.mxu0 %v64
    %264 = vmatmul.mubr.f32.gmra.mrb[0].mxu0 %v63
    %v265 = vpop.f32.mrb[0].mxu0
    %v266 = vadd.f32 0.0, %v265
    %v267 = vpop.f32.mrb[0].mxu0
    %v268 = vadd.f32 0.0, %v267
    %269 = vmatprep.mubr.f32.mxu0 %v66
    %270 = vmatmul.mubr.f32.gmra.mrb[0].mxu0 %v65
    %v271 = vpop.f32.mrb[0].mxu0
    %v272 = vadd.f32 0.0, %v271
    %v273 = vpop.f32.mrb[0].mxu0
    %v274 = vadd.f32 0.0, %v273
    %275 = vmatprep.mubr.f32.mxu0 %v68
    %276 = vmatmul.mubr.f32.gmra.mrb[0].mxu0 %v67
    %v277 = vpop.f32.mrb[0].mxu0
    %v278 = vadd.f32 0.0, %v277
    %v279 = vpop.f32.mrb[0].mxu0
    %v280 = vadd.f32 0.0, %v279
    %281 = vmatprep.mubr.f32.mxu0 %v70
    %282 = vmatmul.mubr.f32.gmra.mrb[0].mxu0 %v69
    %v283 = vpop.f32.mrb[0].mxu0
    %v284 = vadd.f32 0.0, %v283
    %v285 = vpop.f32.mrb[0].mxu0
    %v286 = vadd.f32 0.0, %v285
    %287 = vmatprep.mubr.f32.mxu0 %v72
    %288 = vmatmul.mubr.f32.gmra.mrb[0].mxu0 %v71
    %v289 = vpop.f32.mrb[0].mxu0
    %v290 = vadd.f32 0.0, %v289
    %v291 = vpop.f32.mrb[0].mxu0
    %v292 = vadd.f32 0.0, %v291
    %293 = vmatprep.mubr.f32.mxu0 %v74
    %294 = vmatmul.mubr.f32.gmra.mrb[0].mxu0 %v73
    %v295 = vpop.f32.mrb[0].mxu0
    %v296 = vadd.f32 0.0, %v295
    %v297 = vpop.f32.mrb[0].mxu0
    %v298 = vadd.f32 0.0, %v297
    %299 = vdwg.mxu0
    %300 = vst [vmem:[#allocation7] sm:$0xff] %v206
    %301 = vst [vmem:[#allocation7 + $0x8] sm:$0xff] %v208
    %302 = vst [vmem:[#allocation7 + $0x10] sm:$0xff] %v212
    %303 = vst [vmem:[#allocation7 + $0x18] sm:$0xff] %v214
    %304 = vst [vmem:[#allocation7 + $0x20] sm:$0xff] %v218
    %305 = vst [vmem:[#allocation7 + $0x28] sm:$0xff] %v220
    %306 = vst [vmem:[#allocation7 + $0x30] sm:$0xff] %v224
    %307 = vst [vmem:[#allocation7 + $0x38] sm:$0xff] %v226
    %308 = vst [vmem:[#allocation7 + $0x40] sm:$0xff] %v230
    %309 = vst [vmem:[#allocation7 + $0x48] sm:$0xff] %v232
    %310 = vst [vmem:[#allocation7 + $0x50] sm:$0xff] %v236
    %311 = vst [vmem:[#allocation7 + $0x58] sm:$0xff] %v238
    %312 = vst [vmem:[#allocation7 + $0x60] sm:$0xff] %v242
    %313 = vst [vmem:[#allocation7 + $0x68] sm:$0xff] %v244
    %314 = vst [vmem:[#allocation7 + $0x70] sm:$0xff] %v248
    %315 = vst [vmem:[#allocation7 + $0x78] sm:$0xff] %v250
    %316 = vst [vmem:[#allocation7 + $0x80] sm:$0xff] %v254
    %317 = vst [vmem:[#allocation7 + $0x88] sm:$0xff] %v256
    %318 = vst [vmem:[#allocation7 + $0x90] sm:$0xff] %v260
    %319 = vst [vmem:[#allocation7 + $0x98] sm:$0xff] %v262
    %320 = vst [vmem:[#allocation7 + $0xa0] sm:$0xff] %v266
    %321 = vst [vmem:[#allocation7 + $0xa8] sm:$0xff] %v268
    %322 = vst [vmem:[#allocation7 + $0xb0] sm:$0xff] %v272
    %323 = vst [vmem:[#allocation7 + $0xb8] sm:$0xff] %v274
    %324 = vst [vmem:[#allocation7 + $0xc0] sm:$0xff] %v278
    %325 = vst [vmem:[#allocation7 + $0xc8] sm:$0xff] %v280
    %326 = vst [vmem:[#allocation7 + $0xd0] sm:$0xff] %v284
    %327 = vst [vmem:[#allocation7 + $0xd8] sm:$0xff] %v286
    %328 = vst [vmem:[#allocation7 + $0xe0] sm:$0xff] %v290
    %329 = vst [vmem:[#allocation7 + $0xe8] sm:$0xff] %v292
    %330 = vst [vmem:[#allocation7 + $0xf0] sm:$0xff] %v296
    %331 = vst [vmem:[#allocation7 + $0xf8] sm:$0xff] %v298
    %v332 = vld [vmem:[%s2] sm:$0x3]
    %v334 = vlaneseq
    %v335 = vshrl.u32 %v334, 7
    %v336 = vsub.s32 0, %v335
    %v337 = vrot.slane %v332, %v336
    %v338 = vlaneseq
    %v339 = vshrl.u32 %v338, 7
    %v340 = vsub.s32 1, %v339
    %v341 = vrot.slane %v332, %v340
    %v344 = vadd.f32 %v206, %v337
    %v345 = vadd.f32 %v208, %v341
    %v348 = vcombine.low %v344, %v345
    %v350 = vunpack.c.l.s4 1966171168
    %v351 = vunpack.c.0.s8 %v350
    %v352 = vlaneseq
    %v353 = vshrl.u32 %v352, 7
    %v354 = vsub.s32 %v351, %v353
    %v355 = vrot.slane %v348, %v354
    %v357 = vunpack.c.l.s4 1966171168
    %v358 = vunpack.c.0.s8 %v357
    %v359 = vlaneseq
    %v360 = vshrl.u32 %v359, 7
    %v361 = vsub.s32 %v358, %v360
    %v362 = vrot.slane %v355, %v361
    %v364 = vlaneseq
    %vm365 = vcmp.ge.s32.totalorder %v364, 0
    %vm366 = vcmp.lt.s32.totalorder %v364, 256
    %vm367 = vmand %vm365, %vm366
    %368 = vst.msk [vmem:[#allocation7] ss:$8 sm:$0x3] %vm367, %v362
    %369 = vst.msk [vmem:[#allocation7] ss:$8 sm:$0x0] %vm367, %v362
    %v370 = vadd.f32 %v254, %v337
    %v371 = vadd.f32 %v256, %v341
    %v374 = vcombine.low %v370, %v371
    %v376 = vunpack.c.l.s4 1966171168
    %v377 = vunpack.c.0.s8 %v376
    %v378 = vlaneseq
    %v379 = vshrl.u32 %v378, 7
    %v380 = vsub.s32 %v377, %v379
    %v381 = vrot.slane %v374, %v380
    %v383 = vunpack.c.l.s4 1966171168
    %v384 = vunpack.c.0.s8 %v383
    %v385 = vlaneseq
    %v386 = vshrl.u32 %v385, 7
    %v387 = vsub.s32 %v384, %v386
    %v388 = vrot.slane %v381, %v387
    %s390 = scalar_lea.vmem [#allocation7], 128
    %391 = vst.msk [vmem:[%s390] ss:$8 sm:$0x3] %vm367, %v388
    %392 = vst.msk [vmem:[%s390] ss:$8 sm:$0x0] %vm367, %v388
    // Predicated region
    $region22: #{tpu_custom_call.1} parent=1 // pred_check
      _
    $region23: #{tpu_custom_call.1} parent=1 // pred_check_branch
      %394 = sbr.rel (0) target = $region25
    $region24: #{tpu_custom_call.1} parent=1 // pred_region
      %s396 = ssub.s32 4096, 4096
      %397 = vsyncadd [#allocation4], %s396
      %s398 = sshll.u32 [#allocation7], 4
      %s399 = int_to_ptr.vmem [resolvable:$true] %s398
      %404 = dma.vmem_to_hbm [thread:$0]  %s399, 4096, %s3, [#allocation4], 256, 256, 16
    $region25: #{tpu_custom_call.1} parent=1 // pred_fallthru
      _
    // Predicated region
    $region26: #{tpu_custom_call.1} parent=1 // pred_check
      _
    $region27: #{tpu_custom_call.1} parent=1 // pred_check_branch
      %406 = sbr.rel (0) target = $region29
    $region28: #{tpu_custom_call.1} parent=1 // pred_region
      %407 = dma.done [#allocation4], 4096
    $region29: #{tpu_custom_call.1} parent=1 // pred_fallthru
      _
    %408 = vsyncpa [#allocation3], 1
    %409 = vsyncpa [#allocation6], 1
    %410 = vsyncpa [#allocation4], 1

</llo_original>
